<compile_context>
chip_gen: v7x
topology: tpu7x:2x2x1
jax: 0.10.0
libtpu: 0.0.40
codegen_flags: <defaults>
</compile_context>

<pallas_src>
import functools

import jax
import jax.numpy as jnp
from jax import lax
from jax.experimental import pallas as pl
from jax.experimental.pallas import tpu as pltpu


def _hash32(x):
    """lowbias32-style avalanche hash, uint32 -> uint32 (counter-based RNG)."""
    x = x ^ (x >> 16)
    x = x * jnp.uint32(0x7FEB352D)
    x = x ^ (x >> 15)
    x = x * jnp.uint32(0x846CA68B)
    x = x ^ (x >> 16)
    return x


def _erfinv_f32(x):
    """Single-precision erfinv approximation (Giles), branchless via where."""
    w = -jnp.log((1.0 - x) * (1.0 + x))
    w = jnp.maximum(w, 0.0)

    # |erfinv| small branch (w < 5)
    w1 = w - 2.5
    p1 = jnp.float32(2.81022636e-08)
    for c in (3.43273939e-07, -3.5233877e-06, -4.39150654e-06, 2.1858087e-04,
              -1.25372503e-03, -4.17768164e-03, 2.46640727e-01, 1.50140941e+00):
        p1 = p1 * w1 + c

    # tail branch (w >= 5)
    w2 = jnp.sqrt(w) - 3.0
    p2 = jnp.float32(-2.00214257e-04)
    for c in (1.00950558e-04, 1.34934322e-03, -3.67342844e-03, 5.73950773e-03,
              -7.6224613e-03, 9.43887047e-03, 1.00167406e+00, 2.83297682e+00):
        p2 = p2 * w2 + c

    return jnp.where(w < 5.0, p1, p2) * x


def _gaussian_noise_kernel(seed_ref, x_ref, o_ref, *, sigma, mean, block_rows):
    i = pl.program_id(0)

    # Absolute element index -> noise is independent of tiling and grid order.
    row = lax.broadcasted_iota(jnp.int32, (block_rows, 128), 0)
    col = lax.broadcasted_iota(jnp.int32, (block_rows, 128), 1)
    idx = ((i * block_rows + row) * 128 + col).astype(jnp.uint32)

    seed = seed_ref[0].astype(jnp.uint32)
    bits = _hash32(idx ^ (seed * jnp.uint32(0x9E3779B9) + jnp.uint32(0x85EBCA6B)))

    # Top 24 bits -> u strictly inside (0, 1) so the log() above stays finite.
    u = ((bits >> 8).astype(jnp.int32).astype(jnp.float32) + 0.5) * (1.0 / (1 << 24))
    z = jnp.float32(1.4142135623730951) * _erfinv_f32(2.0 * u - 1.0)   # N(0, 1)
    noise = z * jnp.float32(sigma) + jnp.float32(mean)

    # Add in f32 and cast once at the end (keeps small-sigma noise for bf16).
    o_ref[...] = (x_ref[...].astype(jnp.float32) + noise).astype(o_ref.dtype)


def gaussian_noise(x, seed, sigma, mean=0.0, tile_rows=1024):
    """Forward of GaussianNoise: x + Normal(mean, sigma) noise of x's shape."""
    orig_shape = x.shape
    total = x.size
    lanes = 128

    rows = pl.cdiv(total, lanes)
    lane_pad = rows * lanes - total

    # Big lane-dense blocks (default 1024x128 = 512 KiB f32) so the ~0.35 us
    # per-step pipeline overhead is amortized and we run near the HBM roofline.
    # Rounded to a multiple of 16 (packed layout for 16-bit dtypes too); the
    # double-buffered in+out footprint (~4x block bytes ~= 2 MiB) is far below
    # the scoped-VMEM defaults on v5e/v6e/v7x, so no vmem_limit_bytes needed.
    block_rows = max(16, min(int(tile_rows), pl.cdiv(rows, 16) * 16))
    grid = pl.cdiv(rows, block_rows)

    xf = x.reshape(-1)
    if lane_pad:  # only pad the <=127-element lane remainder; no row padding
        xf = jnp.concatenate([xf, jnp.zeros((lane_pad,), x.dtype)])
    x2 = xf.reshape(rows, lanes)

    seed_arr = jnp.asarray([seed], jnp.int32)
    kern = functools.partial(
        _gaussian_noise_kernel,
        sigma=float(sigma), mean=float(mean), block_rows=block_rows)

    out2 = pl.pallas_call(
        kern,
        out_shape=jax.ShapeDtypeStruct((rows, lanes), x.dtype),
        grid_spec=pltpu.PrefetchScalarGridSpec(
            num_scalar_prefetch=1,
            grid=(grid,),
            in_specs=[pl.BlockSpec((block_rows, lanes), lambda i, seed_ref: (i, 0))],
            out_specs=pl.BlockSpec((block_rows, lanes), lambda i, seed_ref: (i, 0)),
        ),
        compiler_params=pltpu.CompilerParams(
            # Noise depends only on (seed, absolute index): grid steps are
            # independent, so let v7x shard them across both TensorCores.
            dimension_semantics=("parallel",),
        ),
        # TODO(synk): optionally alias x2 -> output (input_output_aliases={1: 0})
        # to drop the extra output allocation when the caller donates x.
    )(seed_arr, x2)

    if lane_pad:
        return out2.reshape(-1)[:total].reshape(orig_shape)
    return out2.reshape(orig_shape)


if __name__ == "__main__":
    key = jax.random.PRNGKey(0)
    x = jax.random.normal(key, (2, 4, 16, 16), dtype=jnp.float32)  # NCHW

    sigma, mean = 0.1, 0.0
    y = gaussian_noise(x, seed=0, sigma=sigma, mean=mean)
    y = jax.block_until_ready(y)

    # Light sanity checks (not a statistical test): shape/dtype preserved,
    # noise finite, roughly the requested scale and roughly centered.
    assert y.shape == x.shape and y.dtype == x.dtype
    diff = y - x
    assert bool(jnp.all(jnp.isfinite(diff)))
    emp_std = float(jnp.std(diff))
    emp_mean = float(jnp.mean(diff))
    assert 0.05 < emp_std < 0.2, f"unexpected noise std {emp_std}"
    assert abs(emp_mean) < 0.03, f"unexpected noise mean {emp_mean}"

    print("KERNEL_OK")
</pallas_src>

<mosaic_0001>
module attributes {stable_mosaic.version = 11 : i64} {
  func.func @_gaussian_noise_kernel(%arg0: i32, %arg1: memref<1xi32, #tpu.memory_space<smem>>, %arg2: memref<16x128xf32, #tpu.memory_space<vmem>>, %arg3: memref<16x128xf32, #tpu.memory_space<vmem>>) attributes {dimension_semantics = [#tpu.dimension_semantics<parallel>], iteration_bounds = array<i64: 1>, scalar_prefetch = 1 : i64, scratch_operands = 0 : i64, tpu.core_type = #tpu.core_type<tc>, window_params = [{transform_indices = @transform_0, window_bounds = array<i64: 16, 128>}, {transform_indices = @transform_1, window_bounds = array<i64: 16, 128>}]} {
    %0 = tpu.iota {dimensions = array<i32: 0>} : vector<16x128xi32>
    %1 = tpu.iota {dimensions = array<i32: 1>} : vector<16x128xi32>
    %c16_i32 = arith.constant 16 : i32
    %2 = arith.muli %arg0, %c16_i32 : i32
    %3 = vector.broadcast %2 : i32 to vector<16x128xi32>
    %4 = arith.addi %3, %0 : vector<16x128xi32>
    %c128_i32 = arith.constant 128 : i32
    %5 = vector.broadcast %c128_i32 : i32 to vector<16x128xi32>
    %6 = arith.muli %4, %5 : vector<16x128xi32>
    %7 = arith.addi %6, %1 : vector<16x128xi32>
    %c0 = arith.constant 0 : index
    %8 = memref.load %arg1[%c0] : memref<1xi32, #tpu.memory_space<smem>>
    %c-1640531527_i32 = arith.constant -1640531527 : i32
    %9 = arith.muli %8, %c-1640531527_i32 : i32
    %c-2048144789_i32 = arith.constant -2048144789 : i32
    %10 = arith.addi %9, %c-2048144789_i32 : i32
    %11 = vector.broadcast %10 : i32 to vector<16x128xi32>
    %12 = arith.xori %7, %11 : vector<16x128xi32>
    %c16_i32_0 = arith.constant 16 : i32
    %13 = vector.broadcast %c16_i32_0 : i32 to vector<16x128xi32>
    %14 = arith.shrui %12, %13 : vector<16x128xi32>
    %15 = arith.xori %12, %14 : vector<16x128xi32>
    %c2146121005_i32 = arith.constant 2146121005 : i32
    %16 = vector.broadcast %c2146121005_i32 : i32 to vector<16x128xi32>
    %17 = arith.muli %15, %16 : vector<16x128xi32>
    %c15_i32 = arith.constant 15 : i32
    %18 = vector.broadcast %c15_i32 : i32 to vector<16x128xi32>
    %19 = arith.shrui %17, %18 : vector<16x128xi32>
    %20 = arith.xori %17, %19 : vector<16x128xi32>
    %c-2073254261_i32 = arith.constant -2073254261 : i32
    %21 = vector.broadcast %c-2073254261_i32 : i32 to vector<16x128xi32>
    %22 = arith.muli %20, %21 : vector<16x128xi32>
    %c16_i32_1 = arith.constant 16 : i32
    %23 = vector.broadcast %c16_i32_1 : i32 to vector<16x128xi32>
    %24 = arith.shrui %22, %23 : vector<16x128xi32>
    %25 = arith.xori %22, %24 : vector<16x128xi32>
    %c8_i32 = arith.constant 8 : i32
    %26 = vector.broadcast %c8_i32 : i32 to vector<16x128xi32>
    %27 = arith.shrui %25, %26 : vector<16x128xi32>
    %28 = arith.sitofp %27 : vector<16x128xi32> to vector<16x128xf32>
    %cst = arith.constant 5.000000e-01 : f32
    %29 = vector.broadcast %cst : f32 to vector<16x128xf32>
    %30 = arith.addf %28, %29 : vector<16x128xf32>
    %cst_2 = arith.constant 5.96046448E-8 : f32
    %31 = vector.broadcast %cst_2 : f32 to vector<16x128xf32>
    %32 = arith.mulf %30, %31 : vector<16x128xf32>
    %cst_3 = arith.constant 2.000000e+00 : f32
    %33 = vector.broadcast %cst_3 : f32 to vector<16x128xf32>
    %34 = arith.mulf %33, %32 : vector<16x128xf32>
    %cst_4 = arith.constant 1.000000e+00 : f32
    %35 = vector.broadcast %cst_4 : f32 to vector<16x128xf32>
    %36 = arith.subf %34, %35 : vector<16x128xf32>
    %cst_5 = arith.constant 1.000000e+00 : f32
    %37 = vector.broadcast %cst_5 : f32 to vector<16x128xf32>
    %38 = arith.subf %37, %36 : vector<16x128xf32>
    %cst_6 = arith.constant 1.000000e+00 : f32
    %39 = vector.broadcast %cst_6 : f32 to vector<16x128xf32>
    %40 = arith.addf %39, %36 : vector<16x128xf32>
    %41 = arith.mulf %38, %40 : vector<16x128xf32>
    %42 = math.log %41 : vector<16x128xf32>
    %cst_7 = arith.constant 0.000000e+00 : f32
    %43 = vector.broadcast %cst_7 : f32 to vector<16x128xf32>
    %44 = arith.subf %43, %42 : vector<16x128xf32>
    %cst_8 = arith.constant 0.000000e+00 : f32
    %45 = vector.broadcast %cst_8 : f32 to vector<16x128xf32>
    %46 = arith.maximumf %44, %45 : vector<16x128xf32>
    %cst_9 = arith.constant 2.500000e+00 : f32
    %47 = vector.broadcast %cst_9 : f32 to vector<16x128xf32>
    %48 = arith.subf %46, %47 : vector<16x128xf32>
    %cst_10 = arith.constant 2.81022636E-8 : f32
    %49 = vector.broadcast %cst_10 : f32 to vector<16x128xf32>
    %50 = arith.mulf %49, %48 : vector<16x128xf32>
    %cst_11 = arith.constant 3.43273939E-7 : f32
    %51 = vector.broadcast %cst_11 : f32 to vector<16x128xf32>
    %52 = arith.addf %50, %51 : vector<16x128xf32>
    %53 = arith.mulf %52, %48 : vector<16x128xf32>
    %cst_12 = arith.constant -3.5233877E-6 : f32
    %54 = vector.broadcast %cst_12 : f32 to vector<16x128xf32>
    %55 = arith.addf %53, %54 : vector<16x128xf32>
    %56 = arith.mulf %55, %48 : vector<16x128xf32>
    %cst_13 = arith.constant -4.39150654E-6 : f32
    %57 = vector.broadcast %cst_13 : f32 to vector<16x128xf32>
    %58 = arith.addf %56, %57 : vector<16x128xf32>
    %59 = arith.mulf %58, %48 : vector<16x128xf32>
    %cst_14 = arith.constant 2.1858087E-4 : f32
    %60 = vector.broadcast %cst_14 : f32 to vector<16x128xf32>
    %61 = arith.addf %59, %60 : vector<16x128xf32>
    %62 = arith.mulf %61, %48 : vector<16x128xf32>
    %cst_15 = arith.constant -0.00125372503 : f32
    %63 = vector.broadcast %cst_15 : f32 to vector<16x128xf32>
    %64 = arith.addf %62, %63 : vector<16x128xf32>
    %65 = arith.mulf %64, %48 : vector<16x128xf32>
    %cst_16 = arith.constant -0.00417768164 : f32
    %66 = vector.broadcast %cst_16 : f32 to vector<16x128xf32>
    %67 = arith.addf %65, %66 : vector<16x128xf32>
    %68 = arith.mulf %67, %48 : vector<16x128xf32>
    %cst_17 = arith.constant 0.246640727 : f32
    %69 = vector.broadcast %cst_17 : f32 to vector<16x128xf32>
    %70 = arith.addf %68, %69 : vector<16x128xf32>
    %71 = arith.mulf %70, %48 : vector<16x128xf32>
    %cst_18 = arith.constant 1.50140941 : f32
    %72 = vector.broadcast %cst_18 : f32 to vector<16x128xf32>
    %73 = arith.addf %71, %72 : vector<16x128xf32>
    %74 = math.sqrt %46 : vector<16x128xf32>
    %cst_19 = arith.constant 3.000000e+00 : f32
    %75 = vector.broadcast %cst_19 : f32 to vector<16x128xf32>
    %76 = arith.subf %74, %75 : vector<16x128xf32>
    %cst_20 = arith.constant -2.00214257E-4 : f32
    %77 = vector.broadcast %cst_20 : f32 to vector<16x128xf32>
    %78 = arith.mulf %77, %76 : vector<16x128xf32>
    %cst_21 = arith.constant 1.00950558E-4 : f32
    %79 = vector.broadcast %cst_21 : f32 to vector<16x128xf32>
    %80 = arith.addf %78, %79 : vector<16x128xf32>
    %81 = arith.mulf %80, %76 : vector<16x128xf32>
    %cst_22 = arith.constant 0.00134934322 : f32
    %82 = vector.broadcast %cst_22 : f32 to vector<16x128xf32>
    %83 = arith.addf %81, %82 : vector<16x128xf32>
    %84 = arith.mulf %83, %76 : vector<16x128xf32>
    %cst_23 = arith.constant -0.00367342844 : f32
    %85 = vector.broadcast %cst_23 : f32 to vector<16x128xf32>
    %86 = arith.addf %84, %85 : vector<16x128xf32>
    %87 = arith.mulf %86, %76 : vector<16x128xf32>
    %cst_24 = arith.constant 0.00573950773 : f32
    %88 = vector.broadcast %cst_24 : f32 to vector<16x128xf32>
    %89 = arith.addf %87, %88 : vector<16x128xf32>
    %90 = arith.mulf %89, %76 : vector<16x128xf32>
    %cst_25 = arith.constant -0.0076224613 : f32
    %91 = vector.broadcast %cst_25 : f32 to vector<16x128xf32>
    %92 = arith.addf %90, %91 : vector<16x128xf32>
    %93 = arith.mulf %92, %76 : vector<16x128xf32>
    %cst_26 = arith.constant 0.00943887047 : f32
    %94 = vector.broadcast %cst_26 : f32 to vector<16x128xf32>
    %95 = arith.addf %93, %94 : vector<16x128xf32>
    %96 = arith.mulf %95, %76 : vector<16x128xf32>
    %cst_27 = arith.constant 1.00167406 : f32
    %97 = vector.broadcast %cst_27 : f32 to vector<16x128xf32>
    %98 = arith.addf %96, %97 : vector<16x128xf32>
    %99 = arith.mulf %98, %76 : vector<16x128xf32>
    %cst_28 = arith.constant 2.83297682 : f32
    %100 = vector.broadcast %cst_28 : f32 to vector<16x128xf32>
    %101 = arith.addf %99, %100 : vector<16x128xf32>
    %cst_29 = arith.constant 5.000000e+00 : f32
    %102 = vector.broadcast %cst_29 : f32 to vector<16x128xf32>
    %103 = arith.cmpf olt, %46, %102 : vector<16x128xf32>
    %104 = arith.select %103, %73, %101 : vector<16x128xi1>, vector<16x128xf32>
    %105 = arith.mulf %104, %36 : vector<16x128xf32>
    %cst_30 = arith.constant 1.41421354 : f32
    %106 = vector.broadcast %cst_30 : f32 to vector<16x128xf32>
    %107 = arith.mulf %106, %105 : vector<16x128xf32>
    %cst_31 = arith.constant 1.000000e-01 : f32
    %108 = vector.broadcast %cst_31 : f32 to vector<16x128xf32>
    %109 = arith.mulf %107, %108 : vector<16x128xf32>
    %cst_32 = arith.constant 0.000000e+00 : f32
    %110 = vector.broadcast %cst_32 : f32 to vector<16x128xf32>
    %111 = arith.addf %109, %110 : vector<16x128xf32>
    %c0_33 = arith.constant 0 : index
    %c0_34 = arith.constant 0 : index
    %112 = vector.load %arg2[%c0_33, %c0_34] : memref<16x128xf32, #tpu.memory_space<vmem>>, vector<16x128xf32>
    %113 = arith.addf %112, %111 : vector<16x128xf32>
    %c0_35 = arith.constant 0 : index
    %c0_36 = arith.constant 0 : index
    %114 = vector.load %arg3[%c0_35, %c0_36] : memref<16x128xf32, #tpu.memory_space<vmem>>, vector<16x128xf32>
    tpu.vector_store %arg3[%c0_35, %c0_36], %113 {strides = array<i32>} : memref<16x128xf32, #tpu.memory_space<vmem>>, vector<16x128xf32>,
    return
  }
  func.func @transform_0(%arg0: i32, %arg1: memref<1xi32, #tpu.memory_space<smem>>) -> (i32, i32) {
    %c0_i32 = arith.constant 0 : i32
    %c0_i32_0 = arith.constant 0 : i32
    return %arg0, %c0_i32 : i32, i32
  }
  func.func @transform_1(%arg0: i32, %arg1: memref<1xi32, #tpu.memory_space<smem>>) -> (i32, i32) {
    %c0_i32 = arith.constant 0 : i32
    %c0_i32_0 = arith.constant 0 : i32
    return %arg0, %c0_i32 : i32, i32
  }
}

</mosaic_0001>

<llo_original>
// kernel: tpu_custom_call.1
$region0: #{tpu_custom_call.1}
  #allocation0 [shape = 'u32[]', space=smem, size = 0x4, offset = 0x4, fixed_abs, tag = 'smem constant byte address 0x4 - core index']
  #allocation1 [shape = 'u32[144,128]{1,0:T(1,128)}', space=vmem, size = 0x12000, scoped, tag = 'internal scratch']
  #allocation2 [shape = 's32[1]{0}', space=sflag, size = 0x4, scoped, tag = 'scoped memory for tpu_custom_call.1']
  #allocation3 [shape = 's32[1]{0:T(128)S(6)}', space=smem, size = 0x200, scoped, tag = 'prefetched SMEM operand 0']
  %s0 = inlined_call_operand.<no memory space> [shape: s32[1], index: 0, kind: input, shape index: {}]
  %s1 = inlined_call_operand.hbm [shape: f32[16,128], index: 1, kind: input, shape index: {}]
  %s2 = inlined_call_operand.hbm [shape: f32[16,128], index: 2, kind: output, shape index: {}]
  %s3 = sld [smem:[#allocation0]]
  $region18: #{tpu_custom_call.1} parent=0
    _
  %s5 = ssub.s32 1, %s3
  %s6 = scalar_select 0, %s5, %s3
  %7 = sst [smem:[#allocation3]] %s0
  $region1: #{tpu_custom_call.1} parent=0
    #allocation4 [shape = 'u8[8192]{0}', space=vmem, size = 0x2000, scoped, tag = 'input window, operand 1, single buffered']
    #allocation5 [shape = 's32[1]{0}', space=sflag, size = 0x4, scoped, tag = 'scoped memory for tpu_custom_call.1']
    #allocation6 [shape = 's32[1]{0}', space=sflag, size = 0x4, scoped, tag = 'scoped memory for tpu_custom_call.1']
    #allocation7 [shape = 'u8[8192]{0}', space=vmem, size = 0x2000, scoped, tag = 'output window, operand 0, single buffered']
    %8 = vsyncpa [#allocation5], 0
    %9 = vsyncpa [#allocation6], 0
    // Predicated region
    $region2: #{tpu_custom_call.1} parent=1 // pred_check
      _
    $region3: #{tpu_custom_call.1} parent=1 // pred_check_branch
      %11 = sbr.rel (0) target = $region5
    $region4: #{tpu_custom_call.1} parent=1 // pred_region
      %s13 = ssub.s32 256, 256
      %14 = vsyncadd [#allocation5], %s13
      %s15 = sshll.u32 [#allocation4], 4
      %s16 = int_to_ptr.vmem [resolvable:$true] %s15
      %21 = dma.hbm_to_vmem [thread:$0]  %s1, 256, %s16, [#allocation5], 128, 128, 8
    $region5: #{tpu_custom_call.1} parent=1 // pred_fallthru
      _
    // Predicated region
    $region6: #{tpu_custom_call.1} parent=1 // pred_check
      _
    $region7: #{tpu_custom_call.1} parent=1 // pred_check_branch
      %23 = sbr.rel (0) target = $region9
    $region8: #{tpu_custom_call.1} parent=1 // pred_region
      %24 = dma.done [#allocation5], 256
    $region9: #{tpu_custom_call.1} parent=1 // pred_fallthru
      _
    %v25 = vlaneseq
    %v26 = vshrl.u32 %v25, 7
    %v27 = vadd.s32 %v26, 8
    %v28 = vlaneseq
    %v29 = vand.u32 %v28, 127
    %s30 = smul.u32 0, 16
    %v31 = vstv %s30
    %v32 = vadd.s32 %v31, %v26
    %v33 = vadd.s32 %v31, %v27
    %v34 = vmul.u32 %v32, 128
    %v35 = vmul.u32 %v33, 128
    %v36 = vadd.s32 %v34, %v29
    %v37 = vadd.s32 %v35, %v29
    %s38 = sld [smem:[#allocation3]]
    %s39 = smul.u32 %s38, 2654435769
    %s40 = sadd.s32 %s39, 2246822507
    %v41 = vstv %s40
    %v42 = vxor.u32 %v36, %v41
    %v43 = vxor.u32 %v37, %v41
    %v44 = vshrl.u32 %v42, 16
    %v45 = vshrl.u32 %v43, 16
    %v46 = vxor.u32 %v42, %v44
    %v47 = vxor.u32 %v43, %v45
    %v48 = vmul.u32 %v46, 2146121005
    %v49 = vmul.u32 %v47, 2146121005
    %v50 = vshrl.u32 %v48, 15
    %v51 = vshrl.u32 %v49, 15
    %v52 = vxor.u32 %v48, %v50
    %v53 = vxor.u32 %v49, %v51
    %v54 = vmul.u32 %v52, 2221713035
    %v55 = vmul.u32 %v53, 2221713035
    %v56 = vshrl.u32 %v54, 16
    %v57 = vshrl.u32 %v55, 16
    %v58 = vxor.u32 %v54, %v56
    %v59 = vxor.u32 %v55, %v57
    %v60 = vshrl.u32 %v58, 8
    %v61 = vshrl.u32 %v59, 8
    %v62 = vcvt.s32.f32 %v60
    %v63 = vcvt.s32.f32 %v61
    %v64 = vadd.f32 %v62, 0.5
    %v65 = vadd.f32 %v63, 0.5
    %v66 = vmul.f32 %v64, 5.9604645e-08
    %v67 = vmul.f32 %v65, 5.9604645e-08
    %v68 = vmul.f32 %v66, 2.0
    %v69 = vmul.f32 %v67, 2.0
    %v70 = vsub.f32 %v68, 1.0
    %v71 = vsub.f32 %v69, 1.0
    %v72 = vsub.f32 1.0, %v70
    %v73 = vsub.f32 1.0, %v71
    %v74 = vadd.f32 %v70, 1.0
    %v75 = vadd.f32 %v71, 1.0
    %v76 = vmul.f32 %v72, %v74
    %v77 = vmul.f32 %v73, %v75
    %v78 = vlog2.pop %v76
    %v79 = vmul.f32 %v78, 0.6931472
    %v80 = vlog2.pop %v77
    %v81 = vmul.f32 %v80, 0.6931472
    %v82 = vsub.f32 0.0, %v79
    %v83 = vsub.f32 0.0, %v81
    %v84 = vmax.f32 %v82, 0.0
    %v85 = vmax.f32 %v83, 0.0
    %v86 = vsub.f32 %v84, 2.5
    %v87 = vsub.f32 %v85, 2.5
    %v88 = vmul.f32 %v86, 2.8102264e-08
    %v89 = vmul.f32 %v87, 2.8102264e-08
    %v90 = vadd.f32 %v88, 3.4327394e-07
    %v91 = vadd.f32 %v89, 3.4327394e-07
    %v92 = vmul.f32 %v90, %v86
    %v93 = vmul.f32 %v91, %v87
    %v94 = vadd.f32 %v92, -3.5233877e-06
    %v95 = vadd.f32 %v93, -3.5233877e-06
    %v96 = vmul.f32 %v94, %v86
    %v97 = vmul.f32 %v95, %v87
    %v98 = vadd.f32 %v96, -4.3915065e-06
    %v99 = vadd.f32 %v97, -4.3915065e-06
    %v100 = vmul.f32 %v98, %v86
    %v101 = vmul.f32 %v99, %v87
    %v102 = vadd.f32 %v100, 0.00021858087
    %v103 = vadd.f32 %v101, 0.00021858087
    %v104 = vmul.f32 %v102, %v86
    %v105 = vmul.f32 %v103, %v87
    %v106 = vadd.f32 %v104, -0.001253725
    %v107 = vadd.f32 %v105, -0.001253725
    %v108 = vmul.f32 %v106, %v86
    %v109 = vmul.f32 %v107, %v87
    %v110 = vadd.f32 %v108, -0.0041776816
    %v111 = vadd.f32 %v109, -0.0041776816
    %v112 = vmul.f32 %v110, %v86
    %v113 = vmul.f32 %v111, %v87
    %v114 = vadd.f32 %v112, 0.24664073
    %v115 = vadd.f32 %v113, 0.24664073
    %v116 = vmul.f32 %v114, %v86
    %v117 = vmul.f32 %v115, %v87
    %v118 = vadd.f32 %v116, 1.5014094
    %v119 = vadd.f32 %v117, 1.5014094
    %v120 = vrsqrt.pop %v84
    %v121 = vmul.f32 %v84, %v120
    %vm122 = vcmp.eq.f32.partialorder %v84, inf
    %v123 = vsel %vm122, %v84, %v121
    %vm124 = vcmp.eq.f32.partialorder %v84, 0.0
    %v125 = vand.u32 %v84, 2147483648
    %v126 = vsel %vm124, %v125, %v123
    %v127 = vrsqrt.pop %v85
    %v128 = vmul.f32 %v85, %v127
    %vm129 = vcmp.eq.f32.partialorder %v85, inf
    %v130 = vsel %vm129, %v85, %v128
    %vm131 = vcmp.eq.f32.partialorder %v85, 0.0
    %v132 = vand.u32 %v85, 2147483648
    %v133 = vsel %vm131, %v132, %v130
    %v134 = vsub.f32 %v126, 3.0
    %v135 = vsub.f32 %v133, 3.0
    %v136 = vmul.f32 %v134, -0.00020021426
    %v137 = vmul.f32 %v135, -0.00020021426
    %v138 = vadd.f32 %v136, 0.00010095056
    %v139 = vadd.f32 %v137, 0.00010095056
    %v140 = vmul.f32 %v138, %v134
    %v141 = vmul.f32 %v139, %v135
    %v142 = vadd.f32 %v140, 0.0013493432
    %v143 = vadd.f32 %v141, 0.0013493432
    %v144 = vmul.f32 %v142, %v134
    %v145 = vmul.f32 %v143, %v135
    %v146 = vadd.f32 %v144, -0.0036734284
    %v147 = vadd.f32 %v145, -0.0036734284
    %v148 = vmul.f32 %v146, %v134
    %v149 = vmul.f32 %v147, %v135
    %v150 = vadd.f32 %v148, 0.0057395077
    %v151 = vadd.f32 %v149, 0.0057395077
    %v152 = vmul.f32 %v150, %v134
    %v153 = vmul.f32 %v151, %v135
    %v154 = vadd.f32 %v152, -0.0076224613
    %v155 = vadd.f32 %v153, -0.0076224613
    %v156 = vmul.f32 %v154, %v134
    %v157 = vmul.f32 %v155, %v135
    %v158 = vadd.f32 %v156, 0.0094388705
    %v159 = vadd.f32 %v157, 0.0094388705
    %v160 = vmul.f32 %v158, %v134
    %v161 = vmul.f32 %v159, %v135
    %v162 = vadd.f32 %v160, 1.001674
    %v163 = vadd.f32 %v161, 1.001674
    %v164 = vmul.f32 %v162, %v134
    %v165 = vmul.f32 %v163, %v135
    %v166 = vadd.f32 %v164, 2.8329768
    %v167 = vadd.f32 %v165, 2.8329768
    %vm168 = vcmp.lt.f32.partialorder %v84, 5.0
    %vm169 = vcmp.lt.f32.partialorder %v85, 5.0
    %v170 = vsel %vm168, %v118, %v166
    %v171 = vsel %vm169, %v119, %v167
    %v172 = vmul.f32 %v170, %v70
    %v173 = vmul.f32 %v171, %v71
    %v174 = vmul.f32 %v172, 1.4142135
    %v175 = vmul.f32 %v173, 1.4142135
    %v176 = vmul.f32 %v174, 0.1
    %v177 = vmul.f32 %v175, 0.1
    %v178 = vadd.f32 %v176, 0.0
    %v179 = vadd.f32 %v177, 0.0
    %v180 = vld [vmem:[#allocation4] sm:$0xff]
    %v181 = vld [vmem:[#allocation4 + $0x8] sm:$0xff]
    %v182 = vadd.f32 %v180, %v178
    %v183 = vadd.f32 %v181, %v179
    %184 = vst [vmem:[#allocation7] sm:$0xff] %v182
    %185 = vst [vmem:[#allocation7 + $0x8] sm:$0xff] %v183
    // Predicated region
    $region10: #{tpu_custom_call.1} parent=1 // pred_check
      _
    $region11: #{tpu_custom_call.1} parent=1 // pred_check_branch
      %187 = sbr.rel (0) target = $region13
    $region12: #{tpu_custom_call.1} parent=1 // pred_region
      %s189 = ssub.s32 256, 256
      %190 = vsyncadd [#allocation6], %s189
      %s191 = sshll.u32 [#allocation7], 4
      %s192 = int_to_ptr.vmem [resolvable:$true] %s191
      %197 = dma.vmem_to_hbm [thread:$0]  %s192, 256, %s2, [#allocation6], 128, 128, 8
    $region13: #{tpu_custom_call.1} parent=1 // pred_fallthru
      _
    // Predicated region
    $region14: #{tpu_custom_call.1} parent=1 // pred_check
      _
    $region15: #{tpu_custom_call.1} parent=1 // pred_check_branch
      %199 = sbr.rel (0) target = $region17
    $region16: #{tpu_custom_call.1} parent=1 // pred_region
      %200 = dma.done [#allocation6], 256
    $region17: #{tpu_custom_call.1} parent=1 // pred_fallthru
      _
    %201 = vsyncpa [#allocation5], 1
    %202 = vsyncpa [#allocation6], 1

</llo_original>
